<compile_context>
chip_gen: v6e
topology: v6e:2x2x1
jax: 0.10.0
libtpu: 0.0.40
codegen_flags: <defaults>
</compile_context>

<pallas_src>
import functools

import jax
import jax.numpy as jnp
from jax.experimental import pallas as pl
from jax.experimental.pallas import tpu as pltpu


def _round_up(n, m):
    return ((n + m - 1) // m) * m


def _make_encoder_kernel(input_dim, fc1_on_vpu):
    def kernel(x_ref, w1_ref, b1_ref, w2_ref, b2_ref,
               wmu_ref, bmu_ref, wlv_ref, blv_ref, mu_ref, lv_ref):
        x = x_ref[...]                                   # (TB, input_dim) f32
        if fc1_on_vpu:
            # Tiny contraction (K=3): unrolled broadcast-FMAs on the VPU avoid a
            # serialized MXU push/pop round-trip for an almost-empty K dimension.
            w1 = w1_ref[...]                             # (input_dim, 128) f32
            h1 = b1_ref[...] + x[:, 0:1] * w1[0:1, :]
            for k in range(1, input_dim):
                h1 = h1 + x[:, k:k + 1] * w1[k:k + 1, :]
        else:
            h1 = jnp.dot(x.astype(jnp.bfloat16),
                         w1_ref[...].astype(jnp.bfloat16),
                         preferred_element_type=jnp.float32) + b1_ref[...]
        h1 = jnp.maximum(h1, 0.0)

        # fc2 (K=128) on the MXU: bf16 operands, f32 accumulation.  No explicit
        # VMEM staging: Mosaic keeps the activation in vregs / temporaries.
        h2 = jnp.dot(h1.astype(jnp.bfloat16), w2_ref[...],
                     preferred_element_type=jnp.float32) + b2_ref[...]
        h2 = jnp.maximum(h2, 0.0)

        # Heads in f32 operands (K=64, tiny): better log_var accuracy downstream.
        mu_ref[...] = (jnp.dot(h2, wmu_ref[...],
                               preferred_element_type=jnp.float32)
                       + bmu_ref[...]).astype(mu_ref.dtype)
        lv_ref[...] = (jnp.dot(h2, wlv_ref[...],
                               preferred_element_type=jnp.float32)
                       + blv_ref[...]).astype(lv_ref.dtype)

    return kernel


def prepare_params(params):
    """One-time parameter preparation (dtype casts), hoisted out of the hot path."""
    return dict(
        w1=params["w1"].astype(jnp.float32),
        b1=params["b1"].astype(jnp.float32),
        w2=params["w2"].astype(jnp.bfloat16),   # MXU operand
        b2=params["b2"].astype(jnp.float32),
        wmu=params["wmu"].astype(jnp.float32),
        bmu=params["bmu"].astype(jnp.float32),
        wlv=params["wlv"].astype(jnp.float32),
        blv=params["blv"].astype(jnp.float32),
    )


def encoder_forward(x, prep, *, block_b=2048):
    """x: [B, input_dim] float32. Returns (mu, log_var), each [B, latent_dim] f32."""
    B, input_dim = x.shape
    latent_dim = prep["wmu"].shape[1]

    # Batch tile: multiple of 16 rows (bf16 sublane packing).  Large tiles amortize
    # the per-grid-step pipeline overhead.  For big batches, cap the tile so the
    # grid has >= 2 steps and "parallel" semantics can shard across the two v7x
    # TensorCores.  No batch padding: the last grid block may be ragged.
    TB = min(block_b, _round_up(B, 16))
    if B >= 512:
        TB = min(TB, _round_up(pl.cdiv(B, 2), 16))
    grid = (pl.cdiv(B, TB),)

    kernel = _make_encoder_kernel(input_dim, fc1_on_vpu=(input_dim <= 8))

    def resident(arr):
        # Same block every grid step -> weight/bias stays resident in VMEM.
        return pl.BlockSpec(arr.shape, lambda i: (0, 0))

    mu, log_var = pl.pallas_call(
        kernel,
        out_shape=(jax.ShapeDtypeStruct((B, latent_dim), jnp.float32),
                   jax.ShapeDtypeStruct((B, latent_dim), jnp.float32)),
        grid=grid,
        in_specs=[
            pl.BlockSpec((TB, input_dim), lambda i: (i, 0)),   # x: tiled over batch
            resident(prep["w1"]), resident(prep["b1"]),
            resident(prep["w2"]), resident(prep["b2"]),
            resident(prep["wmu"]), resident(prep["bmu"]),
            resident(prep["wlv"]), resident(prep["blv"]),
        ],
        out_specs=(pl.BlockSpec((TB, latent_dim), lambda i: (i, 0)),
                   pl.BlockSpec((TB, latent_dim), lambda i: (i, 0))),
        compiler_params=pltpu.CompilerParams(
            dimension_semantics=("parallel",),
            # Explicit scoped-VMEM budget: covers the large-tile working set on
            # v5e (16 MiB default) while staying within v6e/v7x budgets.
            vmem_limit_bytes=32 * 1024 * 1024),
    )(x, prep["w1"], prep["b1"], prep["w2"], prep["b2"],
      prep["wmu"], prep["bmu"], prep["wlv"], prep["blv"])
    return mu, log_var


def init_params(key, input_dim=3, latent_dim=16):
    """Deterministic synthetic init (PyTorch-Linear-like uniform fan-in scaling)."""
    ks = jax.random.split(key, 8)

    def lin(kw, kb, fan_in, fan_out):
        bound = 1.0 / jnp.sqrt(fan_in)
        w = jax.random.uniform(kw, (fan_in, fan_out), jnp.float32, -bound, bound)
        b = jax.random.uniform(kb, (1, fan_out), jnp.float32, -bound, bound)
        return w, b

    w1, b1 = lin(ks[0], ks[1], input_dim, 128)
    w2, b2 = lin(ks[2], ks[3], 128, 64)
    wmu, bmu = lin(ks[4], ks[5], 64, latent_dim)
    wlv, blv = lin(ks[6], ks[7], 64, latent_dim)
    return dict(w1=w1, b1=b1, w2=w2, b2=b2, wmu=wmu, bmu=bmu, wlv=wlv, blv=blv)


def encoder_ref(x, p):
    """Pure-JAX f32 reference of the same forward pass."""
    h = jnp.maximum(x @ p["w1"] + p["b1"], 0.0)
    h = jnp.maximum(h @ p["w2"] + p["b2"], 0.0)
    return h @ p["wmu"] + p["bmu"], h @ p["wlv"] + p["blv"]


if __name__ == "__main__":
    key = jax.random.PRNGKey(0)
    k_x, k_p, k_x2, k_x3 = jax.random.split(key, 4)

    input_dim, latent_dim = 3, 16
    params = init_params(k_p, input_dim=input_dim, latent_dim=latent_dim)
    prep = prepare_params(params)

    fwd = jax.jit(encoder_forward, static_argnames=("block_b",))

    # 1) Small batch (single grid step) -- the module's nominal usage.
    x = jax.random.normal(k_x, (8, input_dim), jnp.float32)
    mu, log_var = fwd(x, prep)
    jax.block_until_ready((mu, log_var))
    mu_ref, lv_ref = encoder_ref(x, params)
    assert mu.shape == (8, latent_dim) and log_var.shape == (8, latent_dim)
    assert jnp.allclose(mu, mu_ref, atol=3e-2, rtol=3e-2)
    assert jnp.allclose(log_var, lv_ref, atol=3e-2, rtol=3e-2)

    # 2) Multi-step grid with a ragged last block (no wrapper-side padding).
    x2 = jax.random.normal(k_x2, (300, input_dim), jnp.float32)
    mu2, lv2 = fwd(x2, prep, block_b=128)
    jax.block_until_ready((mu2, lv2))
    mu2_ref, lv2_ref = encoder_ref(x2, params)
    assert jnp.allclose(mu2, mu2_ref, atol=3e-2, rtol=3e-2)
    assert jnp.allclose(lv2, lv2_ref, atol=3e-2, rtol=3e-2)

    # 3) Batch large enough to trigger the >=2-step (v7x megacore) tile cap.
    x3 = jax.random.normal(k_x3, (700, input_dim), jnp.float32)
    mu3, lv3 = fwd(x3, prep)
    jax.block_until_ready((mu3, lv3))
    mu3_ref, lv3_ref = encoder_ref(x3, params)
    assert jnp.allclose(mu3, mu3_ref, atol=3e-2, rtol=3e-2)
    assert jnp.allclose(lv3, lv3_ref, atol=3e-2, rtol=3e-2)

    print("KERNEL_OK")
</pallas_src>

<mosaic_0001>
module attributes {stable_mosaic.version = 11 : i64} {
  func.func @kernel(%arg0: i32, %arg1: memref<16x3xf32, #tpu.memory_space<vmem>>, %arg2: memref<3x128xf32, #tpu.memory_space<vmem>>, %arg3: memref<1x128xf32, #tpu.memory_space<vmem>>, %arg4: memref<128x64xbf16, #tpu.memory_space<vmem>>, %arg5: memref<1x64xf32, #tpu.memory_space<vmem>>, %arg6: memref<64x16xf32, #tpu.memory_space<vmem>>, %arg7: memref<1x16xf32, #tpu.memory_space<vmem>>, %arg8: memref<64x16xf32, #tpu.memory_space<vmem>>, %arg9: memref<1x16xf32, #tpu.memory_space<vmem>>, %arg10: memref<16x16xf32, #tpu.memory_space<vmem>>, %arg11: memref<16x16xf32, #tpu.memory_space<vmem>>) attributes {dimension_semantics = [#tpu.dimension_semantics<parallel>], iteration_bounds = array<i64: 1>, scalar_prefetch = 0 : i64, scratch_operands = 0 : i64, tpu.core_type = #tpu.core_type<tc>, window_params = [{transform_indices = @transform_0, window_bounds = array<i64: 16, 3>}, {pipeline_mode = #tpu.pipeline_mode<synchronous>, transform_indices = @transform_1, window_bounds = array<i64: 3, 128>}, {pipeline_mode = #tpu.pipeline_mode<synchronous>, transform_indices = @transform_2, window_bounds = array<i64: 1, 128>}, {pipeline_mode = #tpu.pipeline_mode<synchronous>, transform_indices = @transform_3, window_bounds = array<i64: 128, 64>}, {pipeline_mode = #tpu.pipeline_mode<synchronous>, transform_indices = @transform_4, window_bounds = array<i64: 1, 64>}, {pipeline_mode = #tpu.pipeline_mode<synchronous>, transform_indices = @transform_5, window_bounds = array<i64: 64, 16>}, {pipeline_mode = #tpu.pipeline_mode<synchronous>, transform_indices = @transform_6, window_bounds = array<i64: 1, 16>}, {pipeline_mode = #tpu.pipeline_mode<synchronous>, transform_indices = @transform_7, window_bounds = array<i64: 64, 16>}, {pipeline_mode = #tpu.pipeline_mode<synchronous>, transform_indices = @transform_8, window_bounds = array<i64: 1, 16>}, {transform_indices = @transform_9, window_bounds = array<i64: 16, 16>}, {transform_indices = @transform_10, window_bounds = array<i64: 16, 16>}]} {
    %c0 = arith.constant 0 : index
    %c0_0 = arith.constant 0 : index
    %0 = vector.load %arg1[%c0, %c0_0] : memref<16x3xf32, #tpu.memory_space<vmem>>, vector<16x3xf32>
    %c0_1 = arith.constant 0 : index
    %c0_2 = arith.constant 0 : index
    %1 = vector.load %arg2[%c0_1, %c0_2] : memref<3x128xf32, #tpu.memory_space<vmem>>, vector<3x128xf32>
    %c0_3 = arith.constant 0 : index
    %c0_4 = arith.constant 0 : index
    %2 = vector.load %arg3[%c0_3, %c0_4] : memref<1x128xf32, #tpu.memory_space<vmem>>, vector<1x128xf32>
    %3 = vector.extract_strided_slice %0 {offsets = [0, 0], sizes = [16, 1], strides = [1, 1]} : vector<16x3xf32> to vector<16x1xf32>
    %4 = vector.extract_strided_slice %1 {offsets = [0, 0], sizes = [1, 128], strides = [1, 1]} : vector<3x128xf32> to vector<1x128xf32>
    %5 = vector.broadcast %3 : vector<16x1xf32> to vector<16x128xf32>
    %6 = vector.broadcast %4 : vector<1x128xf32> to vector<16x128xf32>
    %7 = arith.mulf %5, %6 : vector<16x128xf32>
    %8 = vector.broadcast %2 : vector<1x128xf32> to vector<16x128xf32>
    %9 = arith.addf %8, %7 : vector<16x128xf32>
    %10 = vector.extract_strided_slice %0 {offsets = [0, 1], sizes = [16, 1], strides = [1, 1]} : vector<16x3xf32> to vector<16x1xf32>
    %11 = vector.extract_strided_slice %1 {offsets = [1, 0], sizes = [1, 128], strides = [1, 1]} : vector<3x128xf32> to vector<1x128xf32>
    %12 = vector.broadcast %10 : vector<16x1xf32> to vector<16x128xf32>
    %13 = vector.broadcast %11 : vector<1x128xf32> to vector<16x128xf32>
    %14 = arith.mulf %12, %13 : vector<16x128xf32>
    %15 = arith.addf %9, %14 : vector<16x128xf32>
    %16 = vector.extract_strided_slice %0 {offsets = [0, 2], sizes = [16, 1], strides = [1, 1]} : vector<16x3xf32> to vector<16x1xf32>
    %17 = vector.extract_strided_slice %1 {offsets = [2, 0], sizes = [1, 128], strides = [1, 1]} : vector<3x128xf32> to vector<1x128xf32>
    %18 = vector.broadcast %16 : vector<16x1xf32> to vector<16x128xf32>
    %19 = vector.broadcast %17 : vector<1x128xf32> to vector<16x128xf32>
    %20 = arith.mulf %18, %19 : vector<16x128xf32>
    %21 = arith.addf %15, %20 : vector<16x128xf32>
    %cst = arith.constant 0.000000e+00 : f32
    %22 = vector.broadcast %cst : f32 to vector<16x128xf32>
    %23 = arith.maximumf %21, %22 : vector<16x128xf32>
    %24 = arith.truncf %23 : vector<16x128xf32> to vector<16x128xbf16>
    %c0_5 = arith.constant 0 : index
    %c0_6 = arith.constant 0 : index
    %25 = vector.load %arg4[%c0_5, %c0_6] : memref<128x64xbf16, #tpu.memory_space<vmem>>, vector<128x64xbf16>
    %cst_7 = arith.constant dense<0.000000e+00> : vector<16x64xf32>
    %26 = tpu.matmul %24, %25, %cst_7 {dimension_numbers = #tpu.dot_dimension_numbers<[1], [0], [0], [1], [0, 0, 1, 1], [], []>} : vector<16x128xbf16>, vector<128x64xbf16>, vector<16x64xf32> -> vector<16x64xf32>
    %c0_8 = arith.constant 0 : index
    %c0_9 = arith.constant 0 : index
    %27 = vector.load %arg5[%c0_8, %c0_9] : memref<1x64xf32, #tpu.memory_space<vmem>>, vector<1x64xf32>
    %28 = vector.broadcast %27 : vector<1x64xf32> to vector<16x64xf32>
    %29 = arith.addf %26, %28 : vector<16x64xf32>
    %cst_10 = arith.constant 0.000000e+00 : f32
    %30 = vector.broadcast %cst_10 : f32 to vector<16x64xf32>
    %31 = arith.maximumf %29, %30 : vector<16x64xf32>
    %c0_11 = arith.constant 0 : index
    %c0_12 = arith.constant 0 : index
    %32 = vector.load %arg6[%c0_11, %c0_12] : memref<64x16xf32, #tpu.memory_space<vmem>>, vector<64x16xf32>
    %cst_13 = arith.constant dense<0.000000e+00> : vector<16x16xf32>
    %33 = tpu.matmul %31, %32, %cst_13 {dimension_numbers = #tpu.dot_dimension_numbers<[1], [0], [0], [1], [0, 0, 1, 1], [], []>} : vector<16x64xf32>, vector<64x16xf32>, vector<16x16xf32> -> vector<16x16xf32>
    %c0_14 = arith.constant 0 : index
    %c0_15 = arith.constant 0 : index
    %34 = vector.load %arg7[%c0_14, %c0_15] : memref<1x16xf32, #tpu.memory_space<vmem>>, vector<1x16xf32>
    %35 = vector.broadcast %34 : vector<1x16xf32> to vector<16x16xf32>
    %36 = arith.addf %33, %35 : vector<16x16xf32>
    %c0_16 = arith.constant 0 : index
    %c0_17 = arith.constant 0 : index
    %37 = vector.load %arg10[%c0_16, %c0_17] : memref<16x16xf32, #tpu.memory_space<vmem>>, vector<16x16xf32>
    tpu.vector_store %arg10[%c0_16, %c0_17], %36 {strides = array<i32>} : memref<16x16xf32, #tpu.memory_space<vmem>>, vector<16x16xf32>,
    %c0_18 = arith.constant 0 : index
    %c0_19 = arith.constant 0 : index
    %38 = vector.load %arg8[%c0_18, %c0_19] : memref<64x16xf32, #tpu.memory_space<vmem>>, vector<64x16xf32>
    %cst_20 = arith.constant dense<0.000000e+00> : vector<16x16xf32>
    %39 = tpu.matmul %31, %38, %cst_20 {dimension_numbers = #tpu.dot_dimension_numbers<[1], [0], [0], [1], [0, 0, 1, 1], [], []>} : vector<16x64xf32>, vector<64x16xf32>, vector<16x16xf32> -> vector<16x16xf32>
    %c0_21 = arith.constant 0 : index
    %c0_22 = arith.constant 0 : index
    %40 = vector.load %arg9[%c0_21, %c0_22] : memref<1x16xf32, #tpu.memory_space<vmem>>, vector<1x16xf32>
    %41 = vector.broadcast %40 : vector<1x16xf32> to vector<16x16xf32>
    %42 = arith.addf %39, %41 : vector<16x16xf32>
    %c0_23 = arith.constant 0 : index
    %c0_24 = arith.constant 0 : index
    %43 = vector.load %arg11[%c0_23, %c0_24] : memref<16x16xf32, #tpu.memory_space<vmem>>, vector<16x16xf32>
    tpu.vector_store %arg11[%c0_23, %c0_24], %42 {strides = array<i32>} : memref<16x16xf32, #tpu.memory_space<vmem>>, vector<16x16xf32>,
    return
  }
  func.func @transform_0(%arg0: i32) -> (i32, i32) {
    %c0_i32 = arith.constant 0 : i32
    %c0_i32_0 = arith.constant 0 : i32
    return %arg0, %c0_i32 : i32, i32
  }
  func.func @transform_1(%arg0: i32) -> (i32, i32) {
    %c0_i32 = arith.constant 0 : i32
    %c0_i32_0 = arith.constant 0 : i32
    %c0_i32_1 = arith.constant 0 : i32
    return %c0_i32, %c0_i32_0 : i32, i32
  }
  func.func @transform_2(%arg0: i32) -> (i32, i32) {
    %c0_i32 = arith.constant 0 : i32
    %c0_i32_0 = arith.constant 0 : i32
    %c0_i32_1 = arith.constant 0 : i32
    return %c0_i32, %c0_i32_0 : i32, i32
  }
  func.func @transform_3(%arg0: i32) -> (i32, i32) {
    %c0_i32 = arith.constant 0 : i32
    %c0_i32_0 = arith.constant 0 : i32
    %c0_i32_1 = arith.constant 0 : i32
    return %c0_i32, %c0_i32_0 : i32, i32
  }
  func.func @transform_4(%arg0: i32) -> (i32, i32) {
    %c0_i32 = arith.constant 0 : i32
    %c0_i32_0 = arith.constant 0 : i32
    %c0_i32_1 = arith.constant 0 : i32
    return %c0_i32, %c0_i32_0 : i32, i32
  }
  func.func @transform_5(%arg0: i32) -> (i32, i32) {
    %c0_i32 = arith.constant 0 : i32
    %c0_i32_0 = arith.constant 0 : i32
    %c0_i32_1 = arith.constant 0 : i32
    return %c0_i32, %c0_i32_0 : i32, i32
  }
  func.func @transform_6(%arg0: i32) -> (i32, i32) {
    %c0_i32 = arith.constant 0 : i32
    %c0_i32_0 = arith.constant 0 : i32
    %c0_i32_1 = arith.constant 0 : i32
    return %c0_i32, %c0_i32_0 : i32, i32
  }
  func.func @transform_7(%arg0: i32) -> (i32, i32) {
    %c0_i32 = arith.constant 0 : i32
    %c0_i32_0 = arith.constant 0 : i32
    %c0_i32_1 = arith.constant 0 : i32
    return %c0_i32, %c0_i32_0 : i32, i32
  }
  func.func @transform_8(%arg0: i32) -> (i32, i32) {
    %c0_i32 = arith.constant 0 : i32
    %c0_i32_0 = arith.constant 0 : i32
    %c0_i32_1 = arith.constant 0 : i32
    return %c0_i32, %c0_i32_0 : i32, i32
  }
  func.func @transform_9(%arg0: i32) -> (i32, i32) {
    %c0_i32 = arith.constant 0 : i32
    %c0_i32_0 = arith.constant 0 : i32
    return %arg0, %c0_i32 : i32, i32
  }
  func.func @transform_10(%arg0: i32) -> (i32, i32) {
    %c0_i32 = arith.constant 0 : i32
    %c0_i32_0 = arith.constant 0 : i32
    return %arg0, %c0_i32 : i32, i32
  }
}

</mosaic_0001>

<llo_original>
// kernel: encoder_forward.1
$region0: #{encoder_forward.1}
  #allocation0 [shape = 'u32[]', space=smem, size = 0x4, offset = 0x4, fixed_abs, tag = 'smem constant byte address 0x4 - core index']
  #allocation1 [shape = 'u32[144,128]{1,0:T(1,128)}', space=vmem, size = 0x12000, scoped, tag = 'internal scratch']
  %s0 = inlined_call_operand.vmem [shape: f32[8,3], index: 0, kind: input, shape index: {}]
  %s1 = inlined_call_operand.vmem [shape: f32[3,128], index: 1, kind: input, shape index: {}]
  %s2 = inlined_call_operand.vmem [shape: f32[1,128], index: 2, kind: input, shape index: {}]
  %s3 = inlined_call_operand.vmem [shape: bf16[128,64], index: 3, kind: input, shape index: {}]
  %s4 = inlined_call_operand.vmem [shape: f32[1,64], index: 4, kind: input, shape index: {}]
  %s5 = inlined_call_operand.vmem [shape: f32[64,16], index: 5, kind: input, shape index: {}]
  %s6 = inlined_call_operand.vmem [shape: f32[1,16], index: 6, kind: input, shape index: {}]
  %s7 = inlined_call_operand.vmem [shape: f32[64,16], index: 7, kind: input, shape index: {}]
  %s8 = inlined_call_operand.vmem [shape: f32[1,16], index: 8, kind: input, shape index: {}]
  %s9 = inlined_call_operand.hbm [shape: f32[8,16], index: 9, kind: output, shape index: {0}]
  %s10 = inlined_call_operand.hbm [shape: f32[8,16], index: 10, kind: output, shape index: {1}]
  %11 = xla_tuple %s9, %s10
  %s12 = sld [smem:[#allocation0]]
  $region54: #{encoder_forward.1} parent=0
    _
  %s14 = ssub.s32 1, %s12
  %s15 = scalar_select 0, %s14, %s12
  $region1: #{encoder_forward.1} parent=0
    #allocation2 [shape = 'u8[8192]{0}', space=vmem, size = 0x2000, scoped, tag = 'output window, operand 0, single buffered']
    #allocation3 [shape = 's32[1]{0}', space=sflag, size = 0x4, scoped, tag = 'scoped memory for encoder_forward.1']
    #allocation4 [shape = 'u8[8192]{0}', space=vmem, size = 0x2000, scoped, tag = 'output window, operand 1, single buffered']
    #allocation5 [shape = 's32[1]{0}', space=sflag, size = 0x4, scoped, tag = 'scoped memory for encoder_forward.1']
    %16 = vsyncpa [#allocation3], 0
    %17 = vsyncpa [#allocation5], 0
    // Predicated region
    $region2: #{encoder_forward.1} parent=1 // pred_check
      _
    $region3: #{encoder_forward.1} parent=1 // pred_check_branch
      %19 = sbr.rel (0) target = $region5
    $region4: #{encoder_forward.1} parent=1 // pred_region
      _
    $region5: #{encoder_forward.1} parent=1 // pred_fallthru
      _
    // Predicated region
    $region6: #{encoder_forward.1} parent=1 // pred_check
      _
    $region7: #{encoder_forward.1} parent=1 // pred_check_branch
      %21 = sbr.rel (0) target = $region9
    $region8: #{encoder_forward.1} parent=1 // pred_region
      _
    $region9: #{encoder_forward.1} parent=1 // pred_fallthru
      _
    // Predicated region
    $region10: #{encoder_forward.1} parent=1 // pred_check
      _
    $region11: #{encoder_forward.1} parent=1 // pred_check_branch
      %23 = sbr.rel (0) target = $region13
    $region12: #{encoder_forward.1} parent=1 // pred_region
      _
    $region13: #{encoder_forward.1} parent=1 // pred_fallthru
      _
    // Predicated region
    $region14: #{encoder_forward.1} parent=1 // pred_check
      _
    $region15: #{encoder_forward.1} parent=1 // pred_check_branch
      %25 = sbr.rel (0) target = $region17
    $region16: #{encoder_forward.1} parent=1 // pred_region
      _
    $region17: #{encoder_forward.1} parent=1 // pred_fallthru
      _
    // Predicated region
    $region18: #{encoder_forward.1} parent=1 // pred_check
      _
    $region19: #{encoder_forward.1} parent=1 // pred_check_branch
      %27 = sbr.rel (0) target = $region21
    $region20: #{encoder_forward.1} parent=1 // pred_region
      _
    $region21: #{encoder_forward.1} parent=1 // pred_fallthru
      _
    // Predicated region
    $region22: #{encoder_forward.1} parent=1 // pred_check
      _
    $region23: #{encoder_forward.1} parent=1 // pred_check_branch
      %29 = sbr.rel (0) target = $region25
    $region24: #{encoder_forward.1} parent=1 // pred_region
      _
    $region25: #{encoder_forward.1} parent=1 // pred_fallthru
      _
    // Predicated region
    $region26: #{encoder_forward.1} parent=1 // pred_check
      _
    $region27: #{encoder_forward.1} parent=1 // pred_check_branch
      %31 = sbr.rel (0) target = $region29
    $region28: #{encoder_forward.1} parent=1 // pred_region
      _
    $region29: #{encoder_forward.1} parent=1 // pred_fallthru
      _
    // Predicated region
    $region30: #{encoder_forward.1} parent=1 // pred_check
      _
    $region31: #{encoder_forward.1} parent=1 // pred_check_branch
      %33 = sbr.rel (0) target = $region33
    $region32: #{encoder_forward.1} parent=1 // pred_region
      _
    $region33: #{encoder_forward.1} parent=1 // pred_fallthru
      _
    // Predicated region
    $region34: #{encoder_forward.1} parent=1 // pred_check
      _
    $region35: #{encoder_forward.1} parent=1 // pred_check_branch
      %35 = sbr.rel (0) target = $region37
    $region36: #{encoder_forward.1} parent=1 // pred_region
      _
    $region37: #{encoder_forward.1} parent=1 // pred_fallthru
      _
    %v37 = vld [vmem:[%s0] sm:$0xff]
    %v38 = vld [vmem:[%s0 + $0x8] sm:$0xff]
    %v39 = vld [vmem:[%s1] sm:$0x7]
    %v40 = vld [vmem:[%s2] sm:$0x1]
    %42 = vset.pattern.permute.xlu0 0
    %43 = vperm.xlu0 %42, %v37
    %v44 = vpop.permute.xlu0 %43
    %47 = vset.pattern.permute.xlu0 0
    %48 = vperm.xlu0 %47, %v38
    %v49 = vpop.permute.xlu0 %48
    %v51 = vlaneseq
    %v52 = vshrl.u32 %v51, 7
    %v53 = vsub.s32 0, %v52
    %v54 = vrot.slane %v39, %v53
    %v55 = vmul.f32 %v44, %v54
    %v56 = vmul.f32 %v49, %v54
    %v58 = vlaneseq
    %v59 = vshrl.u32 %v58, 7
    %v60 = vsub.s32 0, %v59
    %v61 = vrot.slane %v40, %v60
    %v63 = vadd.f32 %v61, %v55
    %v64 = vadd.f32 %v61, %v56
    %65 = vset.pattern.permute.xlu0 1
    %66 = vperm.xlu0 %65, %v37
    %v67 = vpop.permute.xlu0 %66
    %69 = vset.pattern.permute.xlu0 1
    %70 = vperm.xlu0 %69, %v38
    %v71 = vpop.permute.xlu0 %70
    %v73 = vlaneseq
    %v74 = vshrl.u32 %v73, 7
    %v75 = vsub.s32 1, %v74
    %v76 = vrot.slane %v39, %v75
    %v77 = vmul.f32 %v67, %v76
    %v78 = vmul.f32 %v71, %v76
    %v79 = vadd.f32 %v63, %v77
    %v80 = vadd.f32 %v64, %v78
    %81 = vset.pattern.permute.xlu0 2
    %82 = vperm.xlu0 %81, %v37
    %v83 = vpop.permute.xlu0 %82
    %85 = vset.pattern.permute.xlu0 2
    %86 = vperm.xlu0 %85, %v38
    %v87 = vpop.permute.xlu0 %86
    %v89 = vlaneseq
    %v90 = vshrl.u32 %v89, 7
    %v91 = vsub.s32 2, %v90
    %v92 = vrot.slane %v39, %v91
    %v93 = vmul.f32 %v83, %v92
    %v94 = vmul.f32 %v87, %v92
    %v95 = vadd.f32 %v79, %v93
    %v96 = vadd.f32 %v80, %v94
    %v97 = vmax.f32 %v95, 0.0
    %v98 = vmax.f32 %v96, 0.0
    %v99 = vpack.c.bf16 %v98, %v97
    %v100 = vld [vmem:[%s3] sm:$0xf]
    %v101 = vld [vmem:[%s3 + $0x4] sm:$0xf]
    %v102 = vld [vmem:[%s3 + $0x8] sm:$0xf]
    %v103 = vld [vmem:[%s3 + $0xc] sm:$0xf]
    %v104 = vld [vmem:[%s3 + $0x10] sm:$0xf]
    %v105 = vld [vmem:[%s3 + $0x14] sm:$0xf]
    %v106 = vld [vmem:[%s3 + $0x18] sm:$0xf]
    %v107 = vld [vmem:[%s3 + $0x1c] sm:$0xf]
    %v108 = vld [vmem:[%s3 + $0x20] sm:$0xf]
    %v109 = vld [vmem:[%s3 + $0x24] sm:$0xf]
    %v110 = vld [vmem:[%s3 + $0x28] sm:$0xf]
    %v111 = vld [vmem:[%s3 + $0x2c] sm:$0xf]
    %v112 = vld [vmem:[%s3 + $0x30] sm:$0xf]
    %v113 = vld [vmem:[%s3 + $0x34] sm:$0xf]
    %v114 = vld [vmem:[%s3 + $0x38] sm:$0xf]
    %v115 = vld [vmem:[%s3 + $0x3c] sm:$0xf]
    %v116 = vld [vmem:[%s4] sm:$0x1]
    %v118 = vlaneseq
    %v119 = vshrl.u32 %v118, 7
    %v120 = vsub.s32 0, %v119
    %v121 = vrot.slane %v116, %v120
    %v139 = vunpack.c.l.b16 %v100
    %v140 = vunpack.c.l.b16 %v101
    %v141 = vunpack.c.l.b16 %v102
    %v142 = vunpack.c.l.b16 %v103
    %v143 = vunpack.c.l.b16 %v104
    %v144 = vunpack.c.l.b16 %v105
    %v145 = vunpack.c.l.b16 %v106
    %v146 = vunpack.c.l.b16 %v107
    %v147 = vunpack.c.l.b16 %v108
    %v148 = vunpack.c.l.b16 %v109
    %v149 = vunpack.c.l.b16 %v110
    %v150 = vunpack.c.l.b16 %v111
    %v151 = vunpack.c.l.b16 %v112
    %v152 = vunpack.c.l.b16 %v113
    %v153 = vunpack.c.l.b16 %v114
    %v154 = vunpack.c.l.b16 %v115
    %v155 = vpack.c.b16 %v140, %v139
    %v156 = vpack.c.b16 %v142, %v141
    %v157 = vpack.c.b16 %v144, %v143
    %v158 = vpack.c.b16 %v146, %v145
    %v159 = vpack.c.b16 %v148, %v147
    %v160 = vpack.c.b16 %v150, %v149
    %v161 = vpack.c.b16 %v152, %v151
    %v162 = vpack.c.b16 %v154, %v153
    %171 = vmatprep.subr.bf16.mxu0 0
    %172 = vmatpush1.bf16.msra.mxu0 %v162
    %173 = vmatprep.subr.bf16.mxu0 0
    %174 = vmatpush1.bf16.msra.mxu0 %v161
    %175 = vmatprep.subr.bf16.mxu0 0
    %176 = vmatpush1.bf16.msra.mxu0 %v160
    %177 = vmatprep.subr.bf16.mxu0 0
    %178 = vmatpush1.bf16.msra.mxu0 %v159
    %179 = vmatprep.subr.bf16.mxu0 0
    %180 = vmatpush1.bf16.msra.mxu0 %v158
    %181 = vmatprep.subr.bf16.mxu0 0
    %182 = vmatpush1.bf16.msra.mxu0 %v157
    %183 = vmatprep.subr.bf16.mxu0 0
    %184 = vmatpush1.bf16.msra.mxu0 %v156
    %185 = vmatprep.subr.bf16.mxu0 0
    %186 = vmatpush1.bf16.msra.mxu0 %v155
    %187 = vmatprep.subr.bf16.mxu0 0
    %188 = vmatpush2.bf16.msra.mxu0 0
    %189 = vmatprep.subr.bf16.mxu0 0
    %190 = vmatpush2.bf16.msra.mxu0 0
    %191 = vmatprep.subr.bf16.mxu0 0
    %192 = vmatpush2.bf16.msra.mxu0 0
    %193 = vmatprep.subr.bf16.mxu0 0
    %194 = vmatpush2.bf16.msra.mxu0 0
    %195 = vmatprep.subr.bf16.mxu0 0
    %196 = vmatpush2.bf16.msra.mxu0 0
    %197 = vmatprep.subr.bf16.mxu0 0
    %198 = vmatpush2.bf16.msra.mxu0 0
    %199 = vmatprep.subr.bf16.mxu0 0
    %200 = vmatpush2.bf16.msra.mxu0 0
    %201 = vmatprep.subr.bf16.mxu0 0
    %202 = vmatpush2.bf16.msra.mxu0 0
    %203 = vmatprep.mubr.bf16.mxu0 0
    %204 = vmatmul.mubr.bf16.gmra.mxu0 %v99
    %v205 = vpop.f32.mrf.mxu0
    %v206 = vadd.f32 %v121, %v205
    %v207 = vpop.f32.mrf.mxu0
    %v208 = vpop.f32.mrf.mxu0
    %v209 = vadd.f32 %v121, %v208
    %v210 = vpop.f32.mrf.mxu0
    %211 = vdwg.mxu0
    %v212 = vmax.f32 %v206, 0.0
    %v213 = vmax.f32 %v209, 0.0
    %v214 = vld [vmem:[%s5] sm:$0xff]
    %v215 = vld [vmem:[%s5 + $0x8] sm:$0xff]
    %v216 = vld [vmem:[%s5 + $0x10] sm:$0xff]
    %v217 = vld [vmem:[%s5 + $0x18] sm:$0xff]
    %v218 = vld [vmem:[%s5 + $0x20] sm:$0xff]
    %v219 = vld [vmem:[%s5 + $0x28] sm:$0xff]
    %v220 = vld [vmem:[%s5 + $0x30] sm:$0xff]
    %v221 = vld [vmem:[%s5 + $0x38] sm:$0xff]
    %v222 = vld [vmem:[%s6] sm:$0x1]
    %v224 = vlaneseq
    %v225 = vshrl.u32 %v224, 7
    %v226 = vsub.s32 0, %v225
    %v227 = vrot.slane %v222, %v226
    %vm229 = vcmask 523264
    %v231 = vsel %vm229, %v212, 0
    %v234 = vsel %vm229, %v213, 0
    %236 = vmatprep.subr.mxu0 0.0
    %237 = vmatpush1.msra.mxu0 0.0
    %238 = vmatprep.subr.mxu0 0.0
    %239 = vmatpush1.msra.mxu0 0.0
    %240 = vmatprep.subr.mxu0 0.0
    %241 = vmatpush1.msra.mxu0 0.0
    %242 = vmatprep.subr.mxu0 0.0
    %243 = vmatpush1.msra.mxu0 0.0
    %244 = vmatprep.subr.mxu0 0.0
    %245 = vmatpush1.msra.mxu0 0.0
    %246 = vmatprep.subr.mxu0 0.0
    %247 = vmatpush1.msra.mxu0 0.0
    %248 = vmatprep.subr.mxu0 0.0
    %249 = vmatpush1.msra.mxu0 0.0
    %250 = vmatprep.subr.mxu0 0.0
    %251 = vmatpush1.msra.mxu0 0.0
    %252 = vmatprep.subr.mxu0 0.0
    %253 = vmatpush1.msra.mxu0 %v221
    %254 = vmatprep.subr.mxu0 0.0
    %255 = vmatpush1.msra.mxu0 %v220
    %256 = vmatprep.subr.mxu0 0.0
    %257 = vmatpush1.msra.mxu0 %v219
    %258 = vmatprep.subr.mxu0 0.0
    %259 = vmatpush1.msra.mxu0 %v218
    %260 = vmatprep.subr.mxu0 0.0
    %261 = vmatpush1.msra.mxu0 %v217
    %262 = vmatprep.subr.mxu0 0.0
    %263 = vmatpush1.msra.mxu0 %v216
    %264 = vmatprep.subr.mxu0 0.0
    %265 = vmatpush1.msra.mxu0 %v215
    %266 = vmatprep.subr.mxu0 0.0
    %267 = vmatpush1.msra.mxu0 %v214
    %268 = vmatprep.subr.mxu0 0.0
    %269 = vmatpush2.msra.mxu0 0.0
    %270 = vmatprep.subr.mxu0 0.0
    %271 = vmatpush2.msra.mxu0 0.0
    %272 = vmatprep.subr.mxu0 0.0
    %273 = vmatpush2.msra.mxu0 0.0
    %274 = vmatprep.subr.mxu0 0.0
    %275 = vmatpush2.msra.mxu0 0.0
    %276 = vmatprep.subr.mxu0 0.0
    %277 = vmatpush2.msra.mxu0 0.0
    %278 = vmatprep.subr.mxu0 0.0
    %279 = vmatpush2.msra.mxu0 0.0
    %280 = vmatprep.subr.mxu0 0.0
    %281 = vmatpush2.msra.mxu0 0.0
    %282 = vmatprep.subr.mxu0 0.0
    %283 = vmatpush2.msra.mxu0 0.0
    %284 = vmatprep.subr.mxu0 0.0
    %285 = vmatpush2.msra.mxu0 0.0
    %286 = vmatprep.subr.mxu0 0.0
    %287 = vmatpush2.msra.mxu0 0.0
    %288 = vmatprep.subr.mxu0 0.0
    %289 = vmatpush2.msra.mxu0 0.0
    %290 = vmatprep.subr.mxu0 0.0
    %291 = vmatpush2.msra.mxu0 0.0
    %292 = vmatprep.subr.mxu0 0.0
    %293 = vmatpush2.msra.mxu0 0.0
    %294 = vmatprep.subr.mxu0 0.0
    %295 = vmatpush2.msra.mxu0 0.0
    %296 = vmatprep.subr.mxu0 0.0
    %297 = vmatpush2.msra.mxu0 0.0
    %298 = vmatprep.subr.mxu0 0.0
    %299 = vmatpush2.msra.mxu0 0.0
    %300 = vmatprep.mubr.f32.mxu0 0.0
    %301 = vmatmul.mubr.f32.gmra.mxu0 %v231
    %v302 = vpop.f32.mrf.mxu0
    %v303 = vadd.f32 %v227, %v302
    %v304 = vpop.f32.mrf.mxu0
    %305 = vmatprep.mubr.f32.mxu0 0.0
    %306 = vmatmul.mubr.f32.gmra.mxu0 %v234
    %v307 = vpop.f32.mrf.mxu0
    %v308 = vadd.f32 %v227, %v307
    %v309 = vpop.f32.mrf.mxu0
    %310 = vdwg.mxu0
    %vm311 = vcmask 130048
    %312 = vst.msk [vmem:[#allocation2] sm:$0xff] %vm311, %v303
    %313 = vst.msk [vmem:[#allocation2 + $0x8] sm:$0xff] %vm311, %v308
    %v314 = vld [vmem:[%s7] sm:$0xff]
    %v315 = vld [vmem:[%s7 + $0x8] sm:$0xff]
    %v316 = vld [vmem:[%s7 + $0x10] sm:$0xff]
    %v317 = vld [vmem:[%s7 + $0x18] sm:$0xff]
    %v318 = vld [vmem:[%s7 + $0x20] sm:$0xff]
    %v319 = vld [vmem:[%s7 + $0x28] sm:$0xff]
    %v320 = vld [vmem:[%s7 + $0x30] sm:$0xff]
    %v321 = vld [vmem:[%s7 + $0x38] sm:$0xff]
    %v322 = vld [vmem:[%s8] sm:$0x1]
    %v324 = vlaneseq
    %v325 = vshrl.u32 %v324, 7
    %v326 = vsub.s32 0, %v325
    %v327 = vrot.slane %v322, %v326
    %329 = vmatprep.subr.mxu0 0.0
    %330 = vmatpush1.msra.mxu0 0.0
    %331 = vmatprep.subr.mxu0 0.0
    %332 = vmatpush1.msra.mxu0 0.0
    %333 = vmatprep.subr.mxu0 0.0
    %334 = vmatpush1.msra.mxu0 0.0
    %335 = vmatprep.subr.mxu0 0.0
    %336 = vmatpush1.msra.mxu0 0.0
    %337 = vmatprep.subr.mxu0 0.0
    %338 = vmatpush1.msra.mxu0 0.0
    %339 = vmatprep.subr.mxu0 0.0
    %340 = vmatpush1.msra.mxu0 0.0
    %341 = vmatprep.subr.mxu0 0.0
    %342 = vmatpush1.msra.mxu0 0.0
    %343 = vmatprep.subr.mxu0 0.0
    %344 = vmatpush1.msra.mxu0 0.0
    %345 = vmatprep.subr.mxu0 0.0
    %346 = vmatpush1.msra.mxu0 %v321
    %347 = vmatprep.subr.mxu0 0.0
    %348 = vmatpush1.msra.mxu0 %v320
    %349 = vmatprep.subr.mxu0 0.0
    %350 = vmatpush1.msra.mxu0 %v319
    %351 = vmatprep.subr.mxu0 0.0
    %352 = vmatpush1.msra.mxu0 %v318
    %353 = vmatprep.subr.mxu0 0.0
    %354 = vmatpush1.msra.mxu0 %v317
    %355 = vmatprep.subr.mxu0 0.0
    %356 = vmatpush1.msra.mxu0 %v316
    %357 = vmatprep.subr.mxu0 0.0
    %358 = vmatpush1.msra.mxu0 %v315
    %359 = vmatprep.subr.mxu0 0.0
    %360 = vmatpush1.msra.mxu0 %v314
    %361 = vmatprep.subr.mxu0 0.0
    %362 = vmatpush2.msra.mxu0 0.0
    %363 = vmatprep.subr.mxu0 0.0
    %364 = vmatpush2.msra.mxu0 0.0
    %365 = vmatprep.subr.mxu0 0.0
    %366 = vmatpush2.msra.mxu0 0.0
    %367 = vmatprep.subr.mxu0 0.0
    %368 = vmatpush2.msra.mxu0 0.0
    %369 = vmatprep.subr.mxu0 0.0
    %370 = vmatpush2.msra.mxu0 0.0
    %371 = vmatprep.subr.mxu0 0.0
    %372 = vmatpush2.msra.mxu0 0.0
    %373 = vmatprep.subr.mxu0 0.0
    %374 = vmatpush2.msra.mxu0 0.0
    %375 = vmatprep.subr.mxu0 0.0
    %376 = vmatpush2.msra.mxu0 0.0
    %377 = vmatprep.subr.mxu0 0.0
    %378 = vmatpush2.msra.mxu0 0.0
    %379 = vmatprep.subr.mxu0 0.0
    %380 = vmatpush2.msra.mxu0 0.0
    %381 = vmatprep.subr.mxu0 0.0
    %382 = vmatpush2.msra.mxu0 0.0
    %383 = vmatprep.subr.mxu0 0.0
    %384 = vmatpush2.msra.mxu0 0.0
    %385 = vmatprep.subr.mxu0 0.0
    %386 = vmatpush2.msra.mxu0 0.0
    %387 = vmatprep.subr.mxu0 0.0
    %388 = vmatpush2.msra.mxu0 0.0
    %389 = vmatprep.subr.mxu0 0.0
    %390 = vmatpush2.msra.mxu0 0.0
    %391 = vmatprep.subr.mxu0 0.0
    %392 = vmatpush2.msra.mxu0 0.0
    %393 = vmatprep.mubr.f32.mxu0 0.0
    %394 = vmatmul.mubr.f32.gmra.mxu0 %v231
    %v395 = vpop.f32.mrf.mxu0
    %v396 = vadd.f32 %v327, %v395
    %v397 = vpop.f32.mrf.mxu0
    %398 = vmatprep.mubr.f32.mxu0 0.0
    %399 = vmatmul.mubr.f32.gmra.mxu0 %v234
    %v400 = vpop.f32.mrf.mxu0
    %v401 = vadd.f32 %v327, %v400
    %v402 = vpop.f32.mrf.mxu0
    %403 = vdwg.mxu0
    %404 = vst.msk [vmem:[#allocation4] sm:$0xff] %vm311, %v396
    %405 = vst.msk [vmem:[#allocation4 + $0x8] sm:$0xff] %vm311, %v401
    // Predicated region
    $region38: #{encoder_forward.1} parent=1 // pred_check
      _
    $region39: #{encoder_forward.1} parent=1 // pred_check_branch
      %407 = sbr.rel (0) target = $region41
    $region40: #{encoder_forward.1} parent=1 // pred_region
      %s409 = ssub.s32 256, 128
      %410 = vsyncadd [#allocation3], %s409
      %s411 = sshll.u32 [#allocation2], 4
      %s412 = int_to_ptr.vmem [resolvable:$true] %s411
      %417 = dma.vmem_to_hbm [thread:$0]  %s412, 128, %s9, [#allocation3], 128, 128, 8
    $region41: #{encoder_forward.1} parent=1 // pred_fallthru
      _
    // Predicated region
    $region42: #{encoder_forward.1} parent=1 // pred_check
      _
    $region43: #{encoder_forward.1} parent=1 // pred_check_branch
      %419 = sbr.rel (0) target = $region45
    $region44: #{encoder_forward.1} parent=1 // pred_region
      %s421 = ssub.s32 256, 128
      %422 = vsyncadd [#allocation5], %s421
      %s423 = sshll.u32 [#allocation4], 4
      %s424 = int_to_ptr.vmem [resolvable:$true] %s423
      %429 = dma.vmem_to_hbm [thread:$0]  %s424, 128, %s10, [#allocation5], 128, 128, 8
    $region45: #{encoder_forward.1} parent=1 // pred_fallthru
      _
    // Predicated region
    $region46: #{encoder_forward.1} parent=1 // pred_check
      _
    $region47: #{encoder_forward.1} parent=1 // pred_check_branch
      %431 = sbr.rel (0) target = $region49
    $region48: #{encoder_forward.1} parent=1 // pred_region
      %432 = dma.done [#allocation3], 256
    $region49: #{encoder_forward.1} parent=1 // pred_fallthru
      _
    // Predicated region
    $region50: #{encoder_forward.1} parent=1 // pred_check
      _
    $region51: #{encoder_forward.1} parent=1 // pred_check_branch
      %434 = sbr.rel (0) target = $region53
    $region52: #{encoder_forward.1} parent=1 // pred_region
      %435 = dma.done [#allocation5], 256
    $region53: #{encoder_forward.1} parent=1 // pred_fallthru
      _
    %436 = vsyncpa [#allocation3], 1
    %437 = vsyncpa [#allocation5], 1

</llo_original>
